<compile_context>
chip_gen: v7x
topology: tpu7x:2x2x1
jax: 0.10.0
libtpu: 0.0.40
codegen_flags: <defaults>
</compile_context>

<pallas_src>
import functools

import jax
import jax.numpy as jnp
from jax.experimental import pallas as pl
from jax.experimental.pallas import tpu as pltpu

IN_DIM = 1
HIDDEN = 40
OUT_DIM = 1

LANE = 128
H_PAD = 48            # hidden dim padded only to a sublane multiple (40 -> 48)
OUT_PAD = 8           # layer-3 "M" padded to one native sublane tile
B_TILE_DEFAULT = 1024  # batch points per grid step (lane axis); tunable
B_TILE_MAX = 4096      # VMEM-aware cap (h1/h2 are (H_PAD, B_TILE) f32 scratch)


def _mlp_kernel(x_ref, w1_ref, b1_ref, w2t_ref, b2_ref, w3r_ref, b3_ref, o_ref):
    x = x_ref[...]                                              # (1, B_TILE) f32
    # Layer 1 (K == 1): pure-VPU outer product + bias + ReLU.
    h1 = jnp.maximum(w1_ref[...] * x + b1_ref[...], 0.0)        # (H_PAD, B_TILE)
    # Layer 2: bf16 MXU matmul, f32 accumulate, lane-dense N == B_TILE.
    h2 = jnp.dot(w2t_ref[...], h1.astype(jnp.bfloat16),
                 preferred_element_type=jnp.float32)            # (H_PAD, B_TILE)
    h2 = jnp.maximum(h2 + b2_ref[...], 0.0)
    # Layer 3: 8-row MXU matmul (row 0 is the real output, rows 1..7 zero).
    y = jnp.dot(w3r_ref[...], h2, preferred_element_type=jnp.float32)
    o_ref[...] = (y[0:1, :] + b3_ref[...]).astype(o_ref.dtype)  # (1, B_TILE)


def _round_up(n, m):
    return ((n + m - 1) // m) * m


def _choose_b_tile(B, T, b_tile):
    """Lane-aligned batch tile, VMEM-capped, and >=2 grid steps when T == 1."""
    bt = min(b_tile, B_TILE_MAX, _round_up(B, LANE))
    if T == 1 and B > LANE:
        # Keep at least two tiles so the 'parallel' grid can feed both v7x TCs.
        bt = min(bt, _round_up(pl.cdiv(B, 2), LANE))
    return max(LANE, bt)


def _pad_params(params):
    """Column layout (hidden on sublanes), zero-padded 40 -> H_PAD, per task."""
    w1, b1 = params["w1"], params["b1"]   # (T, 1, H), (T, 1, H)
    w2, b2 = params["w2"], params["b2"]   # (T, H, H), (T, 1, H)
    w3, b3 = params["w3"], params["b3"]   # (T, H, 1), (T, 1, 1)
    ph = H_PAD - w2.shape[-1]
    tr = lambda a: jnp.swapaxes(a, -1, -2)
    w1c = jnp.pad(tr(w1), ((0, 0), (0, ph), (0, 0)))             # (T, H_PAD, 1)
    b1c = jnp.pad(tr(b1), ((0, 0), (0, ph), (0, 0)))             # (T, H_PAD, 1)
    w2t = jnp.pad(tr(w2), ((0, 0), (0, ph), (0, ph)))            # (T, H_PAD, H_PAD)
    w2t = w2t.astype(jnp.bfloat16)                               # MXU operand
    b2c = jnp.pad(tr(b2), ((0, 0), (0, ph), (0, 0)))             # (T, H_PAD, 1)
    w3r = jnp.pad(tr(w3), ((0, 0), (0, OUT_PAD - 1), (0, ph)))   # (T, OUT_PAD, H_PAD)
    return w1c, b1c, w2t, b2c, w3r, b3                           # b3 stays (T,1,1)


@functools.partial(jax.jit, static_argnames=("b_tile",))
def maml_sinusoid_forward(x, params, *, b_tile=B_TILE_DEFAULT):
    """x: (T, B, 1) float32.  params: dict of per-task (T, ...) w1,b1,w2,b2,w3,b3."""
    T, B, _ = x.shape
    bt = _choose_b_tile(B, T, b_tile)
    n_tiles = pl.cdiv(B, bt)
    b_pad = n_tiles * bt

    # Batch on the lane axis; pad to a tile multiple.
    x_t = jnp.swapaxes(x.astype(jnp.float32), 1, 2)              # (T, 1, B)
    x_t = jnp.pad(x_t, ((0, 0), (0, 0), (0, b_pad - B)))         # (T, 1, b_pad)
    w1c, b1c, w2t, b2c, w3r, b3c = _pad_params(params)

    # Per-task weight blocks: resident across the inner (batch-tile) grid axis.
    def wspec(a):
        return pl.BlockSpec((None,) + a.shape[1:], lambda t, i: (t, 0, 0))

    y_t = pl.pallas_call(
        _mlp_kernel,
        out_shape=jax.ShapeDtypeStruct((T, 1, b_pad), jnp.float32),
        grid=(T, n_tiles),
        in_specs=[
            pl.BlockSpec((None, 1, bt), lambda t, i: (t, 0, i)),  # x tile
            wspec(w1c), wspec(b1c), wspec(w2t), wspec(b2c), wspec(w3r), wspec(b3c),
        ],
        out_specs=pl.BlockSpec((None, 1, bt), lambda t, i: (t, 0, i)),
        compiler_params=pltpu.CompilerParams(
            dimension_semantics=("parallel", "parallel")),
        cost_estimate=pl.CostEstimate(
            flops=T * b_pad * (2 * H_PAD * H_PAD + 2 * OUT_PAD * H_PAD + 6 * H_PAD),
            transcendentals=0,
            bytes_accessed=(8 * T * b_pad                      # x + y (f32)
                            + 2 * T * H_PAD * H_PAD            # w2t (bf16)
                            + 4 * T * ((3 + OUT_PAD) * H_PAD + 1)),
        ),
    )(x_t, w1c, b1c, w2t, b2c, w3r, b3c)

    return jnp.swapaxes(y_t, 1, 2)[:, :B, :]                    # (T, B, 1)


def init_params(key, num_task=1):
    """Per-task params (leading T axis), PyTorch-Linear-like uniform init."""
    def lin(k, fan_in, fan_out):
        bound = 1.0 / jnp.sqrt(jnp.float32(fan_in))
        kw, kb = jax.random.split(k)
        w = jax.random.uniform(kw, (fan_in, fan_out), jnp.float32, -bound, bound)
        b = jax.random.uniform(kb, (1, fan_out), jnp.float32, -bound, bound)
        return w, b

    def one(k):
        k1, k2, k3 = jax.random.split(k, 3)
        w1, b1 = lin(k1, IN_DIM, HIDDEN)
        w2, b2 = lin(k2, HIDDEN, HIDDEN)
        w3, b3 = lin(k3, HIDDEN, OUT_DIM)
        return {"w1": w1, "b1": b1, "w2": w2, "b2": b2, "w3": w3, "b3": b3}

    return jax.vmap(one)(jax.random.split(key, num_task))


def _reference(x, p):
    """Pure-JAX f32 reference (per-task vmapped MLP)."""
    def one(xt, w1, b1, w2, b2, w3, b3):
        h1 = jnp.maximum(xt @ w1 + b1, 0.0)
        h2 = jnp.maximum(h1 @ w2 + b2, 0.0)
        return h2 @ w3 + b3
    return jax.vmap(one)(x, p["w1"], p["b1"], p["w2"], p["b2"], p["w3"], p["b3"])


if __name__ == "__main__":
    key = jax.random.PRNGKey(0)
    kx, kp = jax.random.split(key)

    # Fused MAML workload: 2 task-adapted parameter sets x 200 sample points,
    # all evaluated by a single pallas_call (grid = tasks x batch tiles).
    T, B = 2, 200  # B not a tile multiple -> exercises batch padding
    x = jax.random.uniform(kx, (T, B, IN_DIM), jnp.float32, -5.0, 5.0)
    params = init_params(kp, num_task=T)

    y = maml_sinusoid_forward(x, params)
    y = jax.block_until_ready(y)

    y_ref = _reference(x, params)
    assert y.shape == (T, B, OUT_DIM)
    err = float(jnp.max(jnp.abs(y - y_ref)))
    # Tolerance loosened vs. the f32 reference because layer 2 runs with bf16
    # MXU operands (f32 accumulation).
    assert jnp.allclose(y, y_ref, atol=5e-2, rtol=5e-2), err

    print("KERNEL_OK")
</pallas_src>

<mosaic_0001>
module attributes {stable_mosaic.version = 11 : i64} {
  func.func @_mlp_kernel(%arg0: i32, %arg1: i32, %arg2: memref<1x1x256xf32, #tpu.memory_space<vmem>>, %arg3: memref<1x48x1xf32, #tpu.memory_space<vmem>>, %arg4: memref<1x48x1xf32, #tpu.memory_space<vmem>>, %arg5: memref<1x48x48xbf16, #tpu.memory_space<vmem>>, %arg6: memref<1x48x1xf32, #tpu.memory_space<vmem>>, %arg7: memref<1x8x48xf32, #tpu.memory_space<vmem>>, %arg8: memref<1x1x1xf32, #tpu.memory_space<vmem>>, %arg9: memref<1x1x256xf32, #tpu.memory_space<vmem>>) attributes {dimension_semantics = [#tpu.dimension_semantics<parallel>, #tpu.dimension_semantics<parallel>], iteration_bounds = array<i64: 2, 1>, scalar_prefetch = 0 : i64, scratch_operands = 0 : i64, tpu.core_type = #tpu.core_type<tc>, window_params = [{transform_indices = @transform_0, window_bounds = array<i64: 1, 1, 256>}, {transform_indices = @transform_1, window_bounds = array<i64: 1, 48, 1>}, {transform_indices = @transform_2, window_bounds = array<i64: 1, 48, 1>}, {transform_indices = @transform_3, window_bounds = array<i64: 1, 48, 48>}, {transform_indices = @transform_4, window_bounds = array<i64: 1, 48, 1>}, {transform_indices = @transform_5, window_bounds = array<i64: 1, 8, 48>}, {transform_indices = @transform_6, window_bounds = array<i64: 1, 1, 1>}, {transform_indices = @transform_7, window_bounds = array<i64: 1, 1, 256>}]} {
    %c0 = arith.constant 0 : index
    %c0_0 = arith.constant 0 : index
    %c0_1 = arith.constant 0 : index
    %0 = vector.load %arg2[%c0, %c0_0, %c0_1] : memref<1x1x256xf32, #tpu.memory_space<vmem>>, vector<1x1x256xf32>
    %1 = vector.shape_cast %0 : vector<1x1x256xf32> to vector<1x256xf32>
    %c0_2 = arith.constant 0 : index
    %c0_3 = arith.constant 0 : index
    %c0_4 = arith.constant 0 : index
    %2 = vector.load %arg3[%c0_2, %c0_3, %c0_4] : memref<1x48x1xf32, #tpu.memory_space<vmem>>, vector<1x48x1xf32>
    %3 = vector.shape_cast %2 : vector<1x48x1xf32> to vector<48x1xf32>
    %4 = vector.broadcast %3 : vector<48x1xf32> to vector<48x256xf32>
    %5 = vector.broadcast %1 : vector<1x256xf32> to vector<48x256xf32>
    %6 = arith.mulf %4, %5 : vector<48x256xf32>
    %c0_5 = arith.constant 0 : index
    %c0_6 = arith.constant 0 : index
    %c0_7 = arith.constant 0 : index
    %7 = vector.load %arg4[%c0_5, %c0_6, %c0_7] : memref<1x48x1xf32, #tpu.memory_space<vmem>>, vector<1x48x1xf32>
    %8 = vector.shape_cast %7 : vector<1x48x1xf32> to vector<48x1xf32>
    %9 = vector.broadcast %8 : vector<48x1xf32> to vector<48x256xf32>
    %10 = arith.addf %6, %9 : vector<48x256xf32>
    %cst = arith.constant 0.000000e+00 : f32
    %11 = vector.broadcast %cst : f32 to vector<48x256xf32>
    %12 = arith.maximumf %10, %11 : vector<48x256xf32>
    %c0_8 = arith.constant 0 : index
    %c0_9 = arith.constant 0 : index
    %c0_10 = arith.constant 0 : index
    %13 = vector.load %arg5[%c0_8, %c0_9, %c0_10] : memref<1x48x48xbf16, #tpu.memory_space<vmem>>, vector<1x48x48xbf16>
    %14 = vector.shape_cast %13 : vector<1x48x48xbf16> to vector<48x48xbf16>
    %15 = arith.truncf %12 : vector<48x256xf32> to vector<48x256xbf16>
    %cst_11 = arith.constant dense<0.000000e+00> : vector<48x256xf32>
    %16 = tpu.matmul %14, %15, %cst_11 {dimension_numbers = #tpu.dot_dimension_numbers<[1], [0], [0], [1], [0, 0, 1, 1], [], []>} : vector<48x48xbf16>, vector<48x256xbf16>, vector<48x256xf32> -> vector<48x256xf32>
    %c0_12 = arith.constant 0 : index
    %c0_13 = arith.constant 0 : index
    %c0_14 = arith.constant 0 : index
    %17 = vector.load %arg6[%c0_12, %c0_13, %c0_14] : memref<1x48x1xf32, #tpu.memory_space<vmem>>, vector<1x48x1xf32>
    %18 = vector.shape_cast %17 : vector<1x48x1xf32> to vector<48x1xf32>
    %19 = vector.broadcast %18 : vector<48x1xf32> to vector<48x256xf32>
    %20 = arith.addf %16, %19 : vector<48x256xf32>
    %cst_15 = arith.constant 0.000000e+00 : f32
    %21 = vector.broadcast %cst_15 : f32 to vector<48x256xf32>
    %22 = arith.maximumf %20, %21 : vector<48x256xf32>
    %c0_16 = arith.constant 0 : index
    %c0_17 = arith.constant 0 : index
    %c0_18 = arith.constant 0 : index
    %23 = vector.load %arg7[%c0_16, %c0_17, %c0_18] : memref<1x8x48xf32, #tpu.memory_space<vmem>>, vector<1x8x48xf32>
    %24 = vector.shape_cast %23 : vector<1x8x48xf32> to vector<8x48xf32>
    %cst_19 = arith.constant dense<0.000000e+00> : vector<8x256xf32>
    %25 = tpu.matmul %24, %22, %cst_19 {dimension_numbers = #tpu.dot_dimension_numbers<[1], [0], [0], [1], [0, 0, 1, 1], [], []>} : vector<8x48xf32>, vector<48x256xf32>, vector<8x256xf32> -> vector<8x256xf32>
    %26 = vector.extract_strided_slice %25 {offsets = [0, 0], sizes = [1, 256], strides = [1, 1]} : vector<8x256xf32> to vector<1x256xf32>
    %c0_20 = arith.constant 0 : index
    %c0_21 = arith.constant 0 : index
    %c0_22 = arith.constant 0 : index
    %27 = vector.load %arg8[%c0_20, %c0_21, %c0_22] : memref<1x1x1xf32, #tpu.memory_space<vmem>>, vector<1x1x1xf32>
    %28 = vector.shape_cast %27 : vector<1x1x1xf32> to vector<1x1xf32>
    %29 = vector.broadcast %28 : vector<1x1xf32> to vector<1x256xf32>
    %30 = arith.addf %26, %29 : vector<1x256xf32>
    %c0_23 = arith.constant 0 : index
    %c0_24 = arith.constant 0 : index
    %c0_25 = arith.constant 0 : index
    %31 = vector.load %arg9[%c0_23, %c0_24, %c0_25] : memref<1x1x256xf32, #tpu.memory_space<vmem>>, vector<1x1x256xf32>
    %32 = vector.shape_cast %31 : vector<1x1x256xf32> to vector<1x256xf32>
    %33 = vector.shape_cast %30 : vector<1x256xf32> to vector<1x1x256xf32>
    tpu.vector_store %arg9[%c0_23, %c0_24, %c0_25], %33 {strides = array<i32>} : memref<1x1x256xf32, #tpu.memory_space<vmem>>, vector<1x1x256xf32>,
    return
  }
  func.func @transform_0(%arg0: i32, %arg1: i32) -> (i32, i32, i32) {
    %c0_i32 = arith.constant 0 : i32
    %c0_i32_0 = arith.constant 0 : i32
    return %arg0, %c0_i32, %arg1 : i32, i32, i32
  }
  func.func @transform_1(%arg0: i32, %arg1: i32) -> (i32, i32, i32) {
    %c0_i32 = arith.constant 0 : i32
    %c0_i32_0 = arith.constant 0 : i32
    %c0_i32_1 = arith.constant 0 : i32
    return %arg0, %c0_i32, %c0_i32_0 : i32, i32, i32
  }
  func.func @transform_2(%arg0: i32, %arg1: i32) -> (i32, i32, i32) {
    %c0_i32 = arith.constant 0 : i32
    %c0_i32_0 = arith.constant 0 : i32
    %c0_i32_1 = arith.constant 0 : i32
    return %arg0, %c0_i32, %c0_i32_0 : i32, i32, i32
  }
  func.func @transform_3(%arg0: i32, %arg1: i32) -> (i32, i32, i32) {
    %c0_i32 = arith.constant 0 : i32
    %c0_i32_0 = arith.constant 0 : i32
    %c0_i32_1 = arith.constant 0 : i32
    return %arg0, %c0_i32, %c0_i32_0 : i32, i32, i32
  }
  func.func @transform_4(%arg0: i32, %arg1: i32) -> (i32, i32, i32) {
    %c0_i32 = arith.constant 0 : i32
    %c0_i32_0 = arith.constant 0 : i32
    %c0_i32_1 = arith.constant 0 : i32
    return %arg0, %c0_i32, %c0_i32_0 : i32, i32, i32
  }
  func.func @transform_5(%arg0: i32, %arg1: i32) -> (i32, i32, i32) {
    %c0_i32 = arith.constant 0 : i32
    %c0_i32_0 = arith.constant 0 : i32
    %c0_i32_1 = arith.constant 0 : i32
    return %arg0, %c0_i32, %c0_i32_0 : i32, i32, i32
  }
  func.func @transform_6(%arg0: i32, %arg1: i32) -> (i32, i32, i32) {
    %c0_i32 = arith.constant 0 : i32
    %c0_i32_0 = arith.constant 0 : i32
    %c0_i32_1 = arith.constant 0 : i32
    return %arg0, %c0_i32, %c0_i32_0 : i32, i32, i32
  }
  func.func @transform_7(%arg0: i32, %arg1: i32) -> (i32, i32, i32) {
    %c0_i32 = arith.constant 0 : i32
    %c0_i32_0 = arith.constant 0 : i32
    return %arg0, %c0_i32, %arg1 : i32, i32, i32
  }
}

</mosaic_0001>

<llo_original>
// kernel: maml_sinusoid_forward.1
$region0: #{maml_sinusoid_forward.1}
  #allocation0 [shape = 'u32[]', space=smem, size = 0x4, offset = 0x4, fixed_abs, tag = 'smem constant byte address 0x4 - core index']
  #allocation1 [shape = 'u32[144,128]{1,0:T(1,128)}', space=vmem, size = 0x12000, scoped, tag = 'internal scratch']
  %s0 = inlined_call_operand.vmem [shape: f32[2,1,256], index: 0, kind: input, shape index: {}]
  %s1 = inlined_call_operand.vmem [shape: f32[2,48,1], index: 1, kind: input, shape index: {}]
  %s2 = inlined_call_operand.vmem [shape: f32[2,48,1], index: 2, kind: input, shape index: {}]
  %s3 = inlined_call_operand.vmem [shape: bf16[2,48,48], index: 3, kind: input, shape index: {}]
  %s4 = inlined_call_operand.vmem [shape: f32[2,48,1], index: 4, kind: input, shape index: {}]
  %s5 = inlined_call_operand.vmem [shape: f32[2,8,48], index: 5, kind: input, shape index: {}]
  %s6 = inlined_call_operand.vmem [shape: f32[2,1,1], index: 6, kind: input, shape index: {}]
  %s7 = inlined_call_operand.hbm [shape: f32[2,1,256], index: 7, kind: output, shape index: {}]
  %s8 = sld [smem:[#allocation0]]
  $region61: #{maml_sinusoid_forward.1} parent=0
    _
  %s10 = ssub.s32 1, %s8
  %s11 = scalar_select 0, %s10, %s8
  $region1: #{maml_sinusoid_forward.1} parent=0
    #allocation2 [shape = 'u8[2048]{0}', space=vmem, size = 0x800, scoped, tag = 'output window, operand 0']
    #allocation3 [shape = 's32[2]{0}', space=sflag, size = 0x8, scoped, tag = 'scoped memory for maml_sinusoid_forward.1']
    %12 = vsyncpa [#allocation3], 0
    %s13 = scalar_lea.sflag [#allocation3], 1
    %14 = vsyncpa %s13, 0
    loop: start=0, step=1, limit=4
    $region2: #{maml_sinusoid_forward.1} parent=1 // loop_pre_header
      _
    $region3: #{maml_sinusoid_forward.1} parent=1 // loop_header
      %s16 = sphi 0, %s20
      %p17 = scmp.ge.s32.totalorder %s16, 4
      %s23 = sphi 0, %s35
      %s24 = sphi 0, %s31
      %s25 = sphi 0, %s23
      %s26 = sphi 0, %s24
      %s27 = sphi 0, %s25
      %s28 = sphi 0, %s26
      %s40 = sphi 0, %s42
      %s43 = sphi 0, %s40
      %s44 = sphi 0, %s43
      %s60 = sphi 0, %s44
      %s66 = sphi 0, %s68
      %s69 = sphi 0, %s66
      %s70 = sphi 0, %s69
      %s86 = sphi 0, %s70
      %s92 = sphi 0, %s94
      %s95 = sphi 0, %s92
      %s96 = sphi 0, %s95
      %s112 = sphi 0, %s96
      %s118 = sphi 0, %s120
      %s121 = sphi 0, %s118
      %s122 = sphi 0, %s121
      %s138 = sphi 0, %s122
      %s144 = sphi 0, %s146
      %s147 = sphi 0, %s144
      %s148 = sphi 0, %s147
      %s164 = sphi 0, %s148
      %s170 = sphi 0, %s172
      %s173 = sphi 0, %s170
      %s174 = sphi 0, %s173
      %s190 = sphi 0, %s174
      %s196 = sphi 0, %s198
      %s199 = sphi 0, %s196
      %s200 = sphi 0, %s199
      %s216 = sphi 0, %s200
      %s224 = sphi 0, %s226
      %s227 = sphi 0, %s224
      %s228 = sphi 0, %s227
      %s244 = sphi 0, %s228
    $region4: #{maml_sinusoid_forward.1} parent=1 // loop_header_branch
      %19 = sbr.rel (%p17) target = $region8
    $region5: #{maml_sinusoid_forward.1} parent=1 // loop_body
      %s21 = ssub.s32 %s16, 1
      %s22 = ssub.s32 %s16, 2
      %s29 = sadd.s32 1, %s24
      %p30 = scmp.ge.s32.totalorder %s29, 1
      %s31 = scalar_select %p30, 0, %s29
      %s32 = sadd.s32 1, %s23
      %s33 = scalar_select %p30, %s32, %s23
      %p34 = scmp.ge.s32.totalorder %s33, 2
      %s35 = scalar_select %p34, 0, %s33
      %s36 = ssub.s32 %s23, %s35
      %s37 = ssub.s32 %s24, %s31
      %s38 = sor.u32 %s36, %s37
      %p39 = scmp.eq.s32.totalorder %s38, 0
      %s41 = sadd.s32 %s40, 1
      %s42 = scalar_select %p39, %s40, %s41
      %p45 = pneg %p39
      %p46 = scmp.eq.s32.totalorder %s16, 1
      %p47 = por %p45, %p46
      %p48 = scmp.ne.s32.totalorder %s40, %s43
      %p49 = scmp.eq.s32.totalorder %s16, 0
      %p50 = por %p48, %p49
      %p51 = scmp.ne.s32.totalorder %s40, %s43
      %p52 = scmp.eq.s32.totalorder %s21, 1
      %p53 = por %p51, %p52
      %p54 = scmp.ne.s32.totalorder %s43, %s44
      %p55 = scmp.eq.s32.totalorder %s21, 0
      %p56 = por %p54, %p55
      %p57 = scmp.ne.s32.totalorder %s43, %s44
      %p58 = scmp.eq.s32.totalorder %s22, 1
      %p59 = por %p57, %p58
      %p61 = scmp.ne.s32.totalorder %s44, %s60
      %p62 = scmp.eq.s32.totalorder %s22, 0
      %p63 = por %p61, %p62
      %s64 = ssub.s32 %s23, %s35
      %p65 = scmp.eq.s32.totalorder %s64, 0
      %s67 = sadd.s32 %s66, 1
      %s68 = scalar_select %p65, %s66, %s67
      %p71 = pneg %p65
      %p72 = scmp.eq.s32.totalorder %s16, 1
      %p73 = por %p71, %p72
      %p74 = scmp.ne.s32.totalorder %s66, %s69
      %p75 = scmp.eq.s32.totalorder %s16, 0
      %p76 = por %p74, %p75
      %p77 = scmp.ne.s32.totalorder %s66, %s69
      %p78 = scmp.eq.s32.totalorder %s21, 1
      %p79 = por %p77, %p78
      %p80 = scmp.ne.s32.totalorder %s69, %s70
      %p81 = scmp.eq.s32.totalorder %s21, 0
      %p82 = por %p80, %p81
      %p83 = scmp.ne.s32.totalorder %s69, %s70
      %p84 = scmp.eq.s32.totalorder %s22, 1
      %p85 = por %p83, %p84
      %p87 = scmp.ne.s32.totalorder %s70, %s86
      %p88 = scmp.eq.s32.totalorder %s22, 0
      %p89 = por %p87, %p88
      %s90 = ssub.s32 %s23, %s35
      %p91 = scmp.eq.s32.totalorder %s90, 0
      %s93 = sadd.s32 %s92, 1
      %s94 = scalar_select %p91, %s92, %s93
      %p97 = pneg %p91
      %p98 = scmp.eq.s32.totalorder %s16, 1
      %p99 = por %p97, %p98
      %p100 = scmp.ne.s32.totalorder %s92, %s95
      %p101 = scmp.eq.s32.totalorder %s16, 0
      %p102 = por %p100, %p101
      %p103 = scmp.ne.s32.totalorder %s92, %s95
      %p104 = scmp.eq.s32.totalorder %s21, 1
      %p105 = por %p103, %p104
      %p106 = scmp.ne.s32.totalorder %s95, %s96
      %p107 = scmp.eq.s32.totalorder %s21, 0
      %p108 = por %p106, %p107
      %p109 = scmp.ne.s32.totalorder %s95, %s96
      %p110 = scmp.eq.s32.totalorder %s22, 1
      %p111 = por %p109, %p110
      %p113 = scmp.ne.s32.totalorder %s96, %s112
      %p114 = scmp.eq.s32.totalorder %s22, 0
      %p115 = por %p113, %p114
      %s116 = ssub.s32 %s23, %s35
      %p117 = scmp.eq.s32.totalorder %s116, 0
      %s119 = sadd.s32 %s118, 1
      %s120 = scalar_select %p117, %s118, %s119
      %p123 = pneg %p117
      %p124 = scmp.eq.s32.totalorder %s16, 1
      %p125 = por %p123, %p124
      %p126 = scmp.ne.s32.totalorder %s118, %s121
      %p127 = scmp.eq.s32.totalorder %s16, 0
      %p128 = por %p126, %p127
      %p129 = scmp.ne.s32.totalorder %s118, %s121
      %p130 = scmp.eq.s32.totalorder %s21, 1
      %p131 = por %p129, %p130
      %p132 = scmp.ne.s32.totalorder %s121, %s122
      %p133 = scmp.eq.s32.totalorder %s21, 0
      %p134 = por %p132, %p133
      %p135 = scmp.ne.s32.totalorder %s121, %s122
      %p136 = scmp.eq.s32.totalorder %s22, 1
      %p137 = por %p135, %p136
      %p139 = scmp.ne.s32.totalorder %s122, %s138
      %p140 = scmp.eq.s32.totalorder %s22, 0
      %p141 = por %p139, %p140
      %s142 = ssub.s32 %s23, %s35
      %p143 = scmp.eq.s32.totalorder %s142, 0
      %s145 = sadd.s32 %s144, 1
      %s146 = scalar_select %p143, %s144, %s145
      %p149 = pneg %p143
      %p150 = scmp.eq.s32.totalorder %s16, 1
      %p151 = por %p149, %p150
      %p152 = scmp.ne.s32.totalorder %s144, %s147
      %p153 = scmp.eq.s32.totalorder %s16, 0
      %p154 = por %p152, %p153
      %p155 = scmp.ne.s32.totalorder %s144, %s147
      %p156 = scmp.eq.s32.totalorder %s21, 1
      %p157 = por %p155, %p156
      %p158 = scmp.ne.s32.totalorder %s147, %s148
      %p159 = scmp.eq.s32.totalorder %s21, 0
      %p160 = por %p158, %p159
      %p161 = scmp.ne.s32.totalorder %s147, %s148
      %p162 = scmp.eq.s32.totalorder %s22, 1
      %p163 = por %p161, %p162
      %p165 = scmp.ne.s32.totalorder %s148, %s164
      %p166 = scmp.eq.s32.totalorder %s22, 0
      %p167 = por %p165, %p166
      %s168 = ssub.s32 %s23, %s35
      %p169 = scmp.eq.s32.totalorder %s168, 0
      %s171 = sadd.s32 %s170, 1
      %s172 = scalar_select %p169, %s170, %s171
      %p175 = pneg %p169
      %p176 = scmp.eq.s32.totalorder %s16, 1
      %p177 = por %p175, %p176
      %p178 = scmp.ne.s32.totalorder %s170, %s173
      %p179 = scmp.eq.s32.totalorder %s16, 0
      %p180 = por %p178, %p179
      %p181 = scmp.ne.s32.totalorder %s170, %s173
      %p182 = scmp.eq.s32.totalorder %s21, 1
      %p183 = por %p181, %p182
      %p184 = scmp.ne.s32.totalorder %s173, %s174
      %p185 = scmp.eq.s32.totalorder %s21, 0
      %p186 = por %p184, %p185
      %p187 = scmp.ne.s32.totalorder %s173, %s174
      %p188 = scmp.eq.s32.totalorder %s22, 1
      %p189 = por %p187, %p188
      %p191 = scmp.ne.s32.totalorder %s174, %s190
      %p192 = scmp.eq.s32.totalorder %s22, 0
      %p193 = por %p191, %p192
      %s194 = ssub.s32 %s23, %s35
      %p195 = scmp.eq.s32.totalorder %s194, 0
      %s197 = sadd.s32 %s196, 1
      %s198 = scalar_select %p195, %s196, %s197
      %p201 = pneg %p195
      %p202 = scmp.eq.s32.totalorder %s16, 1
      %p203 = por %p201, %p202
      %p204 = scmp.ne.s32.totalorder %s196, %s199
      %p205 = scmp.eq.s32.totalorder %s16, 0
      %p206 = por %p204, %p205
      %p207 = scmp.ne.s32.totalorder %s196, %s199
      %p208 = scmp.eq.s32.totalorder %s21, 1
      %p209 = por %p207, %p208
      %p210 = scmp.ne.s32.totalorder %s199, %s200
      %p211 = scmp.eq.s32.totalorder %s21, 0
      %p212 = por %p210, %p211
      %p213 = scmp.ne.s32.totalorder %s199, %s200
      %p214 = scmp.eq.s32.totalorder %s22, 1
      %p215 = por %p213, %p214
      %p217 = scmp.ne.s32.totalorder %s200, %s216
      %p218 = scmp.eq.s32.totalorder %s22, 0
      %p219 = por %p217, %p218
      %s220 = ssub.s32 %s23, %s35
      %s221 = ssub.s32 %s24, %s31
      %s222 = sor.u32 %s220, %s221
      %p223 = scmp.eq.s32.totalorder %s222, 0
      %s225 = sadd.s32 %s224, 1
      %s226 = scalar_select %p223, %s224, %s225
      %p229 = pneg %p223
      %p230 = scmp.eq.s32.totalorder %s16, 1
      %p231 = por %p229, %p230
      %p232 = scmp.ne.s32.totalorder %s224, %s227
      %p233 = scmp.eq.s32.totalorder %s16, 0
      %p234 = por %p232, %p233
      %p235 = scmp.ne.s32.totalorder %s224, %s227
      %p236 = scmp.eq.s32.totalorder %s21, 1
      %p237 = por %p235, %p236
      %p238 = scmp.ne.s32.totalorder %s227, %s228
      %p239 = scmp.eq.s32.totalorder %s21, 0
      %p240 = por %p238, %p239
      %p241 = scmp.ne.s32.totalorder %s227, %s228
      %p242 = scmp.eq.s32.totalorder %s22, 1
      %p243 = por %p241, %p242
      %p245 = scmp.ne.s32.totalorder %s228, %s244
      %p246 = scmp.eq.s32.totalorder %s22, 0
      %p247 = por %p245, %p246
      %p248 = scmp.le.s32.totalorder 1, %s16
      %p249 = scmp.lt.s32.totalorder %s16, 3
      %p250 = pnand %p248, %p249
      %p251 = pneg %p250
      // Predicated region
      $region9: #{maml_sinusoid_forward.1} parent=5 // pred_check
        _
      $region10: #{maml_sinusoid_forward.1} parent=5 // pred_check_branch
        %253 = sbr.rel (%p250) target = $region12
      $region11: #{maml_sinusoid_forward.1} parent=5 // pred_region
        %s254 = ssub.s32 %s16, 1
      $region12: #{maml_sinusoid_forward.1} parent=5 // pred_fallthru
        _
      %p255 = scmp.lt.s32.totalorder %s16, 2
      // Predicated region
      $region13: #{maml_sinusoid_forward.1} parent=5 // pred_check
        %p256 = pneg %p255
      $region14: #{maml_sinusoid_forward.1} parent=5 // pred_check_branch
        %258 = sbr.rel (%p256) target = $region16
      $region15: #{maml_sinusoid_forward.1} parent=5 // pred_region
        // Predicated region
        $region17: #{maml_sinusoid_forward.1} parent=15 // pred_check
          %p259 = pneg %p50
        $region18: #{maml_sinusoid_forward.1} parent=15 // pred_check_branch
          %261 = sbr.rel (%p259) target = $region20
        $region19: #{maml_sinusoid_forward.1} parent=15 // pred_region
          %s262 = smul.u32 2, %s24
          %p263 = scmp.lt.s32.totalorder %s23, 1
          %s264 = scalar_select %p263, %s23, 1
          %p265 = scmp.lt.s32.totalorder %s262, 1
          %s266 = scalar_select %p265, %s262, 1
          %s267 = smul.addr %s264, 2
          %s268 = sadd.s32 %s266, %s267
          %s269 = scalar_lea.vmem %s0, %s268
          %s270 = smul.u32 2, %s24
        $region20: #{maml_sinusoid_forward.1} parent=15 // pred_fallthru
          _
        // Predicated region
        $region21: #{maml_sinusoid_forward.1} parent=15 // pred_check
          %p271 = pneg %p76
        $region22: #{maml_sinusoid_forward.1} parent=15 // pred_check_branch
          %273 = sbr.rel (%p271) target = $region24
        $region23: #{maml_sinusoid_forward.1} parent=15 // pred_region
          %p274 = scmp.lt.s32.totalorder %s23, 1
          %s275 = scalar_select %p274, %s23, 1
          %s276 = smul.addr %s275, 6
          %s277 = smul.addr %s276, 8
          %s278 = scalar_lea.vmem %s1, %s277
        $region24: #{maml_sinusoid_forward.1} parent=15 // pred_fallthru
          _
        // Predicated region
        $region25: #{maml_sinusoid_forward.1} parent=15 // pred_check
          %p279 = pneg %p102
        $region26: #{maml_sinusoid_forward.1} parent=15 // pred_check_branch
          %281 = sbr.rel (%p279) target = $region28
        $region27: #{maml_sinusoid_forward.1} parent=15 // pred_region
          %p282 = scmp.lt.s32.totalorder %s23, 1
          %s283 = scalar_select %p282, %s23, 1
          %s284 = smul.addr %s283, 6
          %s285 = smul.addr %s284, 8
          %s286 = scalar_lea.vmem %s2, %s285
        $region28: #{maml_sinusoid_forward.1} parent=15 // pred_fallthru
          _
        // Predicated region
        $region29: #{maml_sinusoid_forward.1} parent=15 // pred_check
          %p287 = pneg %p128
        $region30: #{maml_sinusoid_forward.1} parent=15 // pred_check_branch
          %289 = sbr.rel (%p287) target = $region32
        $region31: #{maml_sinusoid_forward.1} parent=15 // pred_region
          %p290 = scmp.lt.s32.totalorder %s23, 1
          %s291 = scalar_select %p290, %s23, 1
          %s292 = smul.addr %s291, 6
          %s293 = smul.addr %s292, 4
          %s294 = scalar_lea.vmem %s3, %s293
        $region32: #{maml_sinusoid_forward.1} parent=15 // pred_fallthru
          _
        // Predicated region
        $region33: #{maml_sinusoid_forward.1} parent=15 // pred_check
          %p295 = pneg %p154
        $region34: #{maml_sinusoid_forward.1} parent=15 // pred_check_branch
          %297 = sbr.rel (%p295) target = $region36
        $region35: #{maml_sinusoid_forward.1} parent=15 // pred_region
          %p298 = scmp.lt.s32.totalorder %s23, 1
          %s299 = scalar_select %p298, %s23, 1
          %s300 = smul.addr %s299, 6
          %s301 = smul.addr %s300, 8
          %s302 = scalar_lea.vmem %s4, %s301
        $region36: #{maml_sinusoid_forward.1} parent=15 // pred_fallthru
          _
        // Predicated region
        $region37: #{maml_sinusoid_forward.1} parent=15 // pred_check
          %p303 = pneg %p180
        $region38: #{maml_sinusoid_forward.1} parent=15 // pred_check_branch
          %305 = sbr.rel (%p303) target = $region40
        $region39: #{maml_sinusoid_forward.1} parent=15 // pred_region
          %p306 = scmp.lt.s32.totalorder %s23, 1
          %s307 = scalar_select %p306, %s23, 1
          %s308 = smul.addr %s307, 8
          %s309 = scalar_lea.vmem %s5, %s308
        $region40: #{maml_sinusoid_forward.1} parent=15 // pred_fallthru
          _
        // Predicated region
        $region41: #{maml_sinusoid_forward.1} parent=15 // pred_check
          %p310 = pneg %p206
        $region42: #{maml_sinusoid_forward.1} parent=15 // pred_check_branch
          %312 = sbr.rel (%p310) target = $region44
        $region43: #{maml_sinusoid_forward.1} parent=15 // pred_region
          %p313 = scmp.lt.s32.totalorder %s23, 1
          %s314 = scalar_select %p313, %s23, 1
          %s315 = scalar_lea.vmem %s6, %s314
        $region44: #{maml_sinusoid_forward.1} parent=15 // pred_fallthru
          _
      $region16: #{maml_sinusoid_forward.1} parent=5 // pred_fallthru
        _
      %p316 = scmp.le.s32.totalorder 1, %s16
      %p317 = scmp.lt.s32.totalorder %s16, 3
      %p318 = pnand %p316, %p317
      %p319 = pneg %p318
      // Predicated region
      $region45: #{maml_sinusoid_forward.1} parent=5 // pred_check
        _
      $region46: #{maml_sinusoid_forward.1} parent=5 // pred_check_branch
        %321 = sbr.rel (%p318) target = $region48
      $region47: #{maml_sinusoid_forward.1} parent=5 // pred_region
        %s322 = ssub.s32 %s16, 1
        %s323 = smul.u32 2, %s26
        %p324 = scmp.lt.s32.totalorder %s25, 1
        %s325 = scalar_select %p324, %s25, 1
        %p326 = scmp.lt.s32.totalorder %s323, 1
        %s327 = scalar_select %p326, %s323, 1
        %s328 = smul.addr %s325, 2
        %s329 = sadd.s32 %s327, %s328
        %s330 = scalar_lea.vmem %s0, %s329
        %p331 = pneg %p56
        %p332 = pneg %p53
        %p333 = scmp.lt.s32.totalorder %s25, 1
        %s334 = scalar_select %p333, %s25, 1
        %s335 = smul.addr %s334, 6
        %s336 = smul.addr %s335, 8
        %s337 = scalar_lea.vmem %s1, %s336
        %p338 = pneg %p82
        %p339 = pneg %p79
        %p340 = scmp.lt.s32.totalorder %s25, 1
        %s341 = scalar_select %p340, %s25, 1
        %s342 = smul.addr %s341, 6
        %s343 = smul.addr %s342, 8
        %s344 = scalar_lea.vmem %s2, %s343
        %p345 = pneg %p108
        %p346 = pneg %p105
        %p347 = scmp.lt.s32.totalorder %s25, 1
        %s348 = scalar_select %p347, %s25, 1
        %s349 = smul.addr %s348, 6
        %s350 = smul.addr %s349, 4
        %s351 = scalar_lea.vmem %s3, %s350
        %p352 = pneg %p134
        %p353 = pneg %p131
        %p354 = scmp.lt.s32.totalorder %s25, 1
        %s355 = scalar_select %p354, %s25, 1
        %s356 = smul.addr %s355, 6
        %s357 = smul.addr %s356, 8
        %s358 = scalar_lea.vmem %s4, %s357
        %p359 = pneg %p160
        %p360 = pneg %p157
        %p361 = scmp.lt.s32.totalorder %s25, 1
        %s362 = scalar_select %p361, %s25, 1
        %s363 = smul.addr %s362, 8
        %s364 = scalar_lea.vmem %s5, %s363
        %p365 = pneg %p186
        %p366 = pneg %p183
        %p367 = scmp.lt.s32.totalorder %s25, 1
        %s368 = scalar_select %p367, %s25, 1
        %s369 = scalar_lea.vmem %s6, %s368
        %p370 = pneg %p212
        %p371 = pneg %p209
        %p372 = pneg %p240
        %p373 = pneg %p237
        %s374 = sand.u32 %s227, 1
        %s375 = scalar_lea.sflag [#allocation3], %s374
        %s376 = sand.u32 %s227, 1
        %s377 = smul.addr %s376, 2
        %s378 = scalar_lea.vmem [#allocation2], %s377
        %s379 = smul.u32 2, %s26
        %p380 = scmp.lt.s32.totalorder %s25, 1
        %s381 = scalar_select %p380, %s25, 1
        %p382 = scmp.lt.s32.totalorder %s379, 1
        %s383 = scalar_select %p382, %s379, 1
        %s384 = smul.addr %s381, 2
        %s385 = sadd.s32 %s383, %s384
        %s386 = scalar_lea.vmem %s0, %s385
        %s387 = smul.u32 2, %s26
        %p388 = scmp.lt.s32.totalorder %s25, 1
        %s389 = scalar_select %p388, %s25, 1
        %s390 = smul.addr %s389, 6
        %s391 = smul.addr %s390, 8
        %s392 = scalar_lea.vmem %s1, %s391
        %p393 = scmp.lt.s32.totalorder %s25, 1
        %s394 = scalar_select %p393, %s25, 1
        %s395 = smul.addr %s394, 6
        %s396 = smul.addr %s395, 8
        %s397 = scalar_lea.vmem %s2, %s396
        %p398 = scmp.lt.s32.totalorder %s25, 1
        %s399 = scalar_select %p398, %s25, 1
        %s400 = smul.addr %s399, 6
        %s401 = smul.addr %s400, 4
        %s402 = scalar_lea.vmem %s3, %s401
        %p403 = scmp.lt.s32.totalorder %s25, 1
        %s404 = scalar_select %p403, %s25, 1
        %s405 = smul.addr %s404, 6
        %s406 = smul.addr %s405, 8
        %s407 = scalar_lea.vmem %s4, %s406
        %p408 = scmp.lt.s32.totalorder %s25, 1
        %s409 = scalar_select %p408, %s25, 1
        %s410 = smul.addr %s409, 8
        %s411 = scalar_lea.vmem %s5, %s410
        %p412 = scmp.lt.s32.totalorder %s25, 1
        %s413 = scalar_select %p412, %s25, 1
        %s414 = scalar_lea.vmem %s6, %s413
        %s415 = smul.u32 2, %s26
        %v417 = vld [vmem:[%s386] sm:$0x3]
        %v418 = vld [vmem:[%s392] sm:$0xff]
        %v419 = vld [vmem:[%s392 + $0x8] sm:$0xff]
        %v420 = vld [vmem:[%s392 + $0x10] sm:$0xff]
        %v421 = vld [vmem:[%s392 + $0x18] sm:$0xff]
        %v422 = vld [vmem:[%s392 + $0x20] sm:$0xff]
        %v423 = vld [vmem:[%s392 + $0x28] sm:$0xff]
        %425 = vset.pattern.permute.xlu0 0
        %426 = vperm.xlu0 %425, %v418
        %v427 = vpop.permute.xlu0 %426
        %430 = vset.pattern.permute.xlu0 0
        %431 = vperm.xlu0 %430, %v419
        %v432 = vpop.permute.xlu0 %431
        %435 = vset.pattern.permute.xlu0 0
        %436 = vperm.xlu0 %435, %v420
        %v437 = vpop.permute.xlu0 %436
        %440 = vset.pattern.permute.xlu0 0
        %441 = vperm.xlu0 %440, %v421
        %v442 = vpop.permute.xlu0 %441
        %445 = vset.pattern.permute.xlu0 0
        %446 = vperm.xlu0 %445, %v422
        %v447 = vpop.permute.xlu0 %446
        %450 = vset.pattern.permute.xlu0 0
        %451 = vperm.xlu0 %450, %v423
        %v452 = vpop.permute.xlu0 %451
        %v455 = vlaneseq
        %v456 = vshrl.u32 %v455, 7
        %v457 = vsub.s32 0, %v456
        %v458 = vrot.slane %v417, %v457
        %v459 = vlaneseq
        %v460 = vshrl.u32 %v459, 7
        %v461 = vsub.s32 1, %v460
        %v462 = vrot.slane %v417, %v461
        %v465 = vmul.f32 %v427, %v458
        %v466 = vmul.f32 %v427, %v462
        %v467 = vmul.f32 %v432, %v458
        %v468 = vmul.f32 %v432, %v462
        %v469 = vmul.f32 %v437, %v458
        %v470 = vmul.f32 %v437, %v462
        %v471 = vmul.f32 %v442, %v458
        %v472 = vmul.f32 %v442, %v462
        %v473 = vmul.f32 %v447, %v458
        %v474 = vmul.f32 %v447, %v462
        %v475 = vmul.f32 %v452, %v458
        %v476 = vmul.f32 %v452, %v462
        %v477 = vld [vmem:[%s397] sm:$0xff]
        %v478 = vld [vmem:[%s397 + $0x8] sm:$0xff]
        %v479 = vld [vmem:[%s397 + $0x10] sm:$0xff]
        %v480 = vld [vmem:[%s397 + $0x18] sm:$0xff]
        %v481 = vld [vmem:[%s397 + $0x20] sm:$0xff]
        %v482 = vld [vmem:[%s397 + $0x28] sm:$0xff]
        %484 = vset.pattern.permute.xlu0 0
        %485 = vperm.xlu0 %484, %v477
        %v486 = vpop.permute.xlu0 %485
        %489 = vset.pattern.permute.xlu0 0
        %490 = vperm.xlu0 %489, %v478
        %v491 = vpop.permute.xlu0 %490
        %494 = vset.pattern.permute.xlu0 0
        %495 = vperm.xlu0 %494, %v479
        %v496 = vpop.permute.xlu0 %495
        %499 = vset.pattern.permute.xlu0 0
        %500 = vperm.xlu0 %499, %v480
        %v501 = vpop.permute.xlu0 %500
        %504 = vset.pattern.permute.xlu0 0
        %505 = vperm.xlu0 %504, %v481
        %v506 = vpop.permute.xlu0 %505
        %509 = vset.pattern.permute.xlu0 0
        %510 = vperm.xlu0 %509, %v482
        %v511 = vpop.permute.xlu0 %510
        %v513 = vadd.f32 %v465, %v486
        %v514 = vadd.f32 %v466, %v486
        %v515 = vadd.f32 %v467, %v491
        %v516 = vadd.f32 %v468, %v491
        %v517 = vadd.f32 %v469, %v496
        %v518 = vadd.f32 %v470, %v496
        %v519 = vadd.f32 %v471, %v501
        %v520 = vadd.f32 %v472, %v501
        %v521 = vadd.f32 %v473, %v506
        %v522 = vadd.f32 %v474, %v506
        %v523 = vadd.f32 %v475, %v511
        %v524 = vadd.f32 %v476, %v511
        %v525 = vmax.f32 %v513, 0.0
        %v526 = vmax.f32 %v514, 0.0
        %v527 = vmax.f32 %v515, 0.0
        %v528 = vmax.f32 %v516, 0.0
        %v529 = vmax.f32 %v517, 0.0
        %v530 = vmax.f32 %v518, 0.0
        %v531 = vmax.f32 %v519, 0.0
        %v532 = vmax.f32 %v520, 0.0
        %v533 = vmax.f32 %v521, 0.0
        %v534 = vmax.f32 %v522, 0.0
        %v535 = vmax.f32 %v523, 0.0
        %v536 = vmax.f32 %v524, 0.0
        %v537 = vld [vmem:[%s402] sm:$0xf]
        %v538 = vld [vmem:[%s402 + $0x4] sm:$0xf]
        %v539 = vld [vmem:[%s402 + $0x8] sm:$0xf]
        %v540 = vld [vmem:[%s402 + $0xc] sm:$0xf]
        %v541 = vld [vmem:[%s402 + $0x10] sm:$0xf]
        %v542 = vld [vmem:[%s402 + $0x14] sm:$0xf]
        %v543 = vpack.c.bf16 %v527, %v525
        %v544 = vpack.c.bf16 %v528, %v526
        %v545 = vpack.c.bf16 %v531, %v529
        %v546 = vpack.c.bf16 %v532, %v530
        %v547 = vpack.c.bf16 %v535, %v533
        %v548 = vpack.c.bf16 %v536, %v534
        %v549 = vld [vmem:[%s407] sm:$0xff]
        %v550 = vld [vmem:[%s407 + $0x8] sm:$0xff]
        %v551 = vld [vmem:[%s407 + $0x10] sm:$0xff]
        %v552 = vld [vmem:[%s407 + $0x18] sm:$0xff]
        %v553 = vld [vmem:[%s407 + $0x20] sm:$0xff]
        %v554 = vld [vmem:[%s407 + $0x28] sm:$0xff]
        %556 = vset.pattern.permute.xlu0 0
        %557 = vperm.xlu0 %556, %v549
        %v558 = vpop.permute.xlu0 %557
        %561 = vset.pattern.permute.xlu0 0
        %562 = vperm.xlu0 %561, %v550
        %v563 = vpop.permute.xlu0 %562
        %566 = vset.pattern.permute.xlu0 0
        %567 = vperm.xlu0 %566, %v551
        %v568 = vpop.permute.xlu0 %567
        %571 = vset.pattern.permute.xlu0 0
        %572 = vperm.xlu0 %571, %v552
        %v573 = vpop.permute.xlu0 %572
        %576 = vset.pattern.permute.xlu0 0
        %577 = vperm.xlu0 %576, %v553
        %v578 = vpop.permute.xlu0 %577
        %581 = vset.pattern.permute.xlu0 0
        %582 = vperm.xlu0 %581, %v554
        %v583 = vpop.permute.xlu0 %582
        %v591 = vunpack.c.l.b16 %v537
        %v592 = vunpack.c.l.b16 %v538
        %v593 = vunpack.c.l.b16 %v539
        %v594 = vunpack.c.l.b16 %v540
        %v595 = vunpack.c.l.b16 %v541
        %v596 = vunpack.c.l.b16 %v542
        %v597 = vpack.c.b16 %v592, %v591
        %v598 = vpack.c.b16 %v594, %v593
        %v599 = vpack.c.b16 %v596, %v595
        %vm600 = vcmask 392192
        %v602 = vsel %vm600, %v597, 0
        %v605 = vsel %vm600, %v598, 0
        %v608 = vsel %vm600, %v599, 0
        %610 = vmatprep.subr.bf16.mxu0 %v544
        %611 = vmatpush1.bf16.msra.mxu0 %v543
        %612 = vmatprep.subr.bf16.mxu0 %v546
        %613 = vmatpush1.bf16.msra.mxu0 %v545
        %614 = vmatprep.subr.bf16.mxu0 %v548
        %615 = vmatpush1.bf16.msra.mxu0 %v547
        %616 = vmatprep.subr.bf16.mxu0 0
        %617 = vmatpush1.bf16.msra.mxu0 0
        %618 = vmatprep.subr.bf16.mxu0 0
        %619 = vmatpush1.bf16.msra.mxu0 0
        %620 = vmatprep.subr.bf16.mxu0 0
        %621 = vmatpush1.bf16.msra.mxu0 0
        %622 = vmatprep.subr.bf16.mxu0 0
        %623 = vmatpush1.bf16.msra.mxu0 0
        %624 = vmatprep.subr.bf16.mxu0 0
        %625 = vmatpush1.bf16.msra.mxu0 0
        %626 = vmatprep.subr.bf16.mxu0 0
        %627 = vmatpush1.bf16.msra.mxu0 0
        %628 = vmatprep.subr.bf16.mxu0 0
        %629 = vmatpush1.bf16.msra.mxu0 0
        %630 = vmatprep.subr.bf16.mxu0 0
        %631 = vmatpush1.bf16.msra.mxu0 0
        %632 = vmatprep.subr.bf16.mxu0 0
        %633 = vmatpush1.bf16.msra.mxu0 0
        %634 = vmatprep.subr.bf16.mxu0 0
        %635 = vmatpush1.bf16.msra.mxu0 0
        %636 = vmatprep.subr.bf16.mxu0 0
        %637 = vmatpush1.bf16.msra.mxu0 0
        %638 = vmatprep.subr.bf16.mxu0 0
        %639 = vmatpush1.bf16.msra.mxu0 0
        %640 = vmatprep.subr.bf16.mxu0 0
        %641 = vmatpush1.bf16.msra.mxu0 0
        %642 = vmatprep.mubr.bf16.mxu0 0
        %643 = vmatmul.mubr.bf16.gmra.mrb[0].mxu0 %v602
        %v644 = vpop.f32.mrb[0].mxu0
        %v645 = vadd.f32 %v558, %v644
        %v646 = vpop.f32.mrb[0].mxu0
        %v647 = vadd.f32 %v558, %v646
        %v648 = vpop.f32.mrb[0].mxu0
        %v649 = vadd.f32 %v563, %v648
        %v650 = vpop.f32.mrb[0].mxu0
        %v651 = vadd.f32 %v563, %v650
        %652 = vmatprep.mubr.bf16.mxu0 0
        %653 = vmatmul.mubr.bf16.gmra.mrb[0].mxu0 %v605
        %v654 = vpop.f32.mrb[0].mxu0
        %v655 = vadd.f32 %v568, %v654
        %v656 = vpop.f32.mrb[0].mxu0
        %v657 = vadd.f32 %v568, %v656
        %v658 = vpop.f32.mrb[0].mxu0
        %v659 = vadd.f32 %v573, %v658
        %v660 = vpop.f32.mrb[0].mxu0
        %v661 = vadd.f32 %v573, %v660
        %662 = vmatprep.mubr.bf16.mxu0 0
        %663 = vmatmul.mubr.bf16.gmra.mrb[0].mxu0 %v608
        %v664 = vpop.f32.mrb[0].mxu0
        %v665 = vadd.f32 %v578, %v664
        %v666 = vpop.f32.mrb[0].mxu0
        %v667 = vadd.f32 %v578, %v666
        %v668 = vpop.f32.mrb[0].mxu0
        %v669 = vadd.f32 %v583, %v668
        %v670 = vpop.f32.mrb[0].mxu0
        %v671 = vadd.f32 %v583, %v670
        %672 = vdwg.mxu0
        %v673 = vmax.f32 %v645, 0.0
        %v674 = vmax.f32 %v647, 0.0
        %v675 = vmax.f32 %v649, 0.0
        %v676 = vmax.f32 %v651, 0.0
        %v677 = vmax.f32 %v655, 0.0
        %v678 = vmax.f32 %v657, 0.0
        %v679 = vmax.f32 %v659, 0.0
        %v680 = vmax.f32 %v661, 0.0
        %v681 = vmax.f32 %v665, 0.0
        %v682 = vmax.f32 %v667, 0.0
        %v683 = vmax.f32 %v669, 0.0
        %v684 = vmax.f32 %v671, 0.0
        %v685 = vld [vmem:[%s411] sm:$0xff]
        %v687 = vsel %vm600, %v685, 0
        %689 = vmatprep.subr.mxu0 %v674
        %690 = vmatpush1.msra.mxu0 %v673
        %691 = vmatprep.subr.mxu0 %v676
        %692 = vmatpush1.msra.mxu0 %v675
        %693 = vmatprep.subr.mxu0 %v678
        %694 = vmatpush1.msra.mxu0 %v677
        %695 = vmatprep.subr.mxu0 %v680
        %696 = vmatpush1.msra.mxu0 %v679
        %697 = vmatprep.subr.mxu0 %v682
        %698 = vmatpush1.msra.mxu0 %v681
        %699 = vmatprep.subr.mxu0 %v684
        %700 = vmatpush1.msra.mxu0 %v683
        %701 = vmatprep.subr.mxu0 0.0
        %702 = vmatpush1.msra.mxu0 0.0
        %703 = vmatprep.subr.mxu0 0.0
        %704 = vmatpush1.msra.mxu0 0.0
        %705 = vmatprep.subr.mxu0 0.0
        %706 = vmatpush1.msra.mxu0 0.0
        %707 = vmatprep.subr.mxu0 0.0
        %708 = vmatpush1.msra.mxu0 0.0
        %709 = vmatprep.subr.mxu0 0.0
        %710 = vmatpush1.msra.mxu0 0.0
        %711 = vmatprep.subr.mxu0 0.0
        %712 = vmatpush1.msra.mxu0 0.0
        %713 = vmatprep.subr.mxu0 0.0
        %714 = vmatpush1.msra.mxu0 0.0
        %715 = vmatprep.subr.mxu0 0.0
        %716 = vmatpush1.msra.mxu0 0.0
        %717 = vmatprep.subr.mxu0 0.0
        %718 = vmatpush1.msra.mxu0 0.0
        %719 = vmatprep.subr.mxu0 0.0
        %720 = vmatpush1.msra.mxu0 0.0
        %721 = vmatprep.subr.mxu0 0.0
        %722 = vmatpush1.msra.mxu0 0.0
        %723 = vmatprep.subr.mxu0 0.0
        %724 = vmatpush1.msra.mxu0 0.0
        %725 = vmatprep.subr.mxu0 0.0
        %726 = vmatpush1.msra.mxu0 0.0
        %727 = vmatprep.subr.mxu0 0.0
        %728 = vmatpush1.msra.mxu0 0.0
        %729 = vmatprep.subr.mxu0 0.0
        %730 = vmatpush1.msra.mxu0 0.0
        %731 = vmatprep.subr.mxu0 0.0
        %732 = vmatpush1.msra.mxu0 0.0
        %733 = vmatprep.subr.mxu0 0.0
        %734 = vmatpush1.msra.mxu0 0.0
        %735 = vmatprep.subr.mxu0 0.0
        %736 = vmatpush1.msra.mxu0 0.0
        %737 = vmatprep.subr.mxu0 0.0
        %738 = vmatpush1.msra.mxu0 0.0
        %739 = vmatprep.subr.mxu0 0.0
        %740 = vmatpush1.msra.mxu0 0.0
        %741 = vmatprep.subr.mxu0 0.0
        %742 = vmatpush1.msra.mxu0 0.0
        %743 = vmatprep.subr.mxu0 0.0
        %744 = vmatpush1.msra.mxu0 0.0
        %745 = vmatprep.subr.mxu0 0.0
        %746 = vmatpush1.msra.mxu0 0.0
        %747 = vmatprep.subr.mxu0 0.0
        %748 = vmatpush1.msra.mxu0 0.0
        %749 = vmatprep.subr.mxu0 0.0
        %750 = vmatpush1.msra.mxu0 0.0
        %751 = vmatprep.subr.mxu0 0.0
        %752 = vmatpush1.msra.mxu0 0.0
        %753 = vmatprep.mubr.f32.mxu0 0.0
        %754 = vmatmul.mubr.f32.gmra.mrb[0].mxu0 %v687
        %v755 = vpop.f32.mrb[0].mxu0
        %v756 = vadd.f32 0.0, %v755
        %v757 = vpop.f32.mrb[0].mxu0
        %v758 = vadd.f32 0.0, %v757
        %759 = vdwg.mxu0
        %v760 = vld [vmem:[%s414] sm:$0x1]
        %762 = vset.pattern.permute.xlu0 0
        %763 = vperm.xlu0 %762, %v760
        %v764 = vpop.permute.xlu0 %763
        %v766 = vlaneseq
        %v767 = vshrl.u32 %v766, 7
        %v768 = vsub.s32 0, %v767
        %v769 = vrot.slane %v764, %v768
        %v770 = vadd.f32 %v756, %v769
        %v771 = vadd.f32 %v758, %v769
        %v774 = vcombine.low %v770, %v771
        %v776 = vunpack.c.l.s4 1966171168
        %v777 = vunpack.c.0.s8 %v776
        %v778 = vlaneseq
        %v779 = vshrl.u32 %v778, 7
        %v780 = vsub.s32 %v777, %v779
        %v781 = vrot.slane %v774, %v780
        %v783 = vunpack.c.l.s4 1966171168
        %v784 = vunpack.c.0.s8 %v783
        %v785 = vlaneseq
        %v786 = vshrl.u32 %v785, 7
        %v787 = vsub.s32 %v784, %v786
        %v788 = vrot.slane %v781, %v787
        %v790 = vlaneseq
        %vm791 = vcmp.ge.s32.totalorder %v790, 0
        %vm792 = vcmp.lt.s32.totalorder %v790, 256
        %vm793 = vmand %vm791, %vm792
        %794 = vst.msk [vmem:[%s378] sm:$0x3] %vm793, %v788
        %s795 = sand.u32 %s227, 1
        %s796 = scalar_lea.sflag [#allocation3], %s795
        %s797 = sand.u32 %s227, 1
        %s798 = smul.addr %s797, 2
        %s799 = scalar_lea.vmem [#allocation2], %s798
        // Predicated region
        $region49: #{maml_sinusoid_forward.1} parent=47 // pred_check
          %p800 = pneg %p237
        $region50: #{maml_sinusoid_forward.1} parent=47 // pred_check_branch
          %802 = sbr.rel (%p800) target = $region52
        $region51: #{maml_sinusoid_forward.1} parent=47 // pred_region
          %s803 = smul.u32 2, %s26
          %s805 = ssub.s32 32, 32
          %806 = vsyncadd %s796, %s805
          %s807 = smul.addr %s25, 2
          %s808 = sadd.s32 %s803, %s807
          %s809 = smul.addr %s808, 16
          %s810 = scalar_lea.hbm %s7, %s809
          %s812 = sshll.u32 %s799, 4
          %s813 = int_to_ptr.vmem [resolvable:$true] %s812
          %815 = dma.vmem_to_hbm [thread:$0]  %s813, 32, %s810, %s796
        $region52: #{maml_sinusoid_forward.1} parent=47 // pred_fallthru
          _
      $region48: #{maml_sinusoid_forward.1} parent=5 // pred_fallthru
        _
      %p816 = scmp.le.s32.totalorder 2, %s16
      // Predicated region
      $region53: #{maml_sinusoid_forward.1} parent=5 // pred_check
        %p817 = pneg %p816
      $region54: #{maml_sinusoid_forward.1} parent=5 // pred_check_branch
        %819 = sbr.rel (%p817) target = $region56
      $region55: #{maml_sinusoid_forward.1} parent=5 // pred_region
        %s820 = ssub.s32 %s16, 2
        // Predicated region
        $region57: #{maml_sinusoid_forward.1} parent=55 // pred_check
          %p821 = pneg %p243
        $region58: #{maml_sinusoid_forward.1} parent=55 // pred_check_branch
          %823 = sbr.rel (%p821) target = $region60
        $region59: #{maml_sinusoid_forward.1} parent=55 // pred_region
          %s824 = sand.u32 %s228, 1
          %s825 = scalar_lea.sflag [#allocation3], %s824
          %s826 = sand.u32 %s228, 1
          %s827 = smul.addr %s826, 2
          %s828 = scalar_lea.vmem [#allocation2], %s827
          %829 = dma.done %s825, 32
        $region60: #{maml_sinusoid_forward.1} parent=55 // pred_fallthru
          _
      $region56: #{maml_sinusoid_forward.1} parent=5 // pred_fallthru
        _
    $region6: #{maml_sinusoid_forward.1} parent=1 // loop_footer
      %s20 = sadd.s32 1, %s16
    $region7: #{maml_sinusoid_forward.1} parent=1 // loop_footer_branch
      %15 = sbr.rel target = $region3
    $region8: #{maml_sinusoid_forward.1} parent=1 // loop_exit
      _
    %830 = vsyncpa [#allocation3], 1
    %s831 = scalar_lea.sflag [#allocation3], 1
    %832 = vsyncpa %s831, 1

</llo_original>
